<compile_context>
chip_gen: v6e
topology: v6e:2x2x1
jax: 0.10.0
libtpu: 0.0.40
codegen_flags: <defaults>
</compile_context>

<pallas_src>
import numpy as np
import jax
import jax.numpy as jnp
from jax.experimental import pallas as pl
from jax.experimental.pallas import tpu as pltpu

SIGMA_PRIOR = float(np.exp(-3.0))
LOG_SIGMA_PRIOR = float(np.log(SIGMA_PRIOR))            # == -3.0 (fp rounding)
INV_2SIG2 = float(0.5 / (SIGMA_PRIOR * SIGMA_PRIOR))    # 1 / (2*sigma_prior^2)
LOG_C = float(-0.5 * np.log(2.0 * np.pi))               # -0.5*log(2*pi)
LOG_P_CONST = LOG_C - LOG_SIGMA_PRIOR                   # used by the reference


def _bayes_layer(x, w_ref, b_ref):
    """One BayesLinear layer on packed, pre-transposed parameters.

    w_ref: (3, in, out) VMEM ref, rows = [w_mu^T, w_rho^T, w_eps^T]
    b_ref: (3, out)     VMEM ref, rows = [b_mu,  b_rho,  b_eps]
    Returns (y, kl) with y = x @ W + b and kl = log_q - log_p.
    """
    w_mu, w_rho, w_eps = w_ref[0], w_ref[1], w_ref[2]
    b_mu = b_ref[0:1, :]
    b_rho = b_ref[1:2, :]
    b_eps = b_ref[2:3, :]

    # exp(rho) once per tensor; reused for softplus and the log_q denominator.
    ew = jnp.exp(w_rho)
    eb = jnp.exp(b_rho)
    w_sigma = jnp.where(w_rho > 20.0, w_rho, jnp.log1p(ew))   # stable softplus
    b_sigma = jnp.where(b_rho > 20.0, b_rho, jnp.log1p(eb))
    dw = w_sigma * w_eps                                       # w - w_mu
    db = b_sigma * b_eps                                       # b - b_mu
    w = w_mu + dw
    b = b_mu + db

    # kl = log_q - log_p with additive constants hoisted out of the reduction:
    #   kl = N*log(sigma_prior) - sum(rho + dw^2/(2 e^2) - w^2/(2 sigma_p^2))
    n_tot = w_mu.size + b_mu.size
    kw = w_rho + (dw * dw) * (0.5 / (ew * ew)) - (w * w) * INV_2SIG2
    kb = b_rho + (db * db) * (0.5 / (eb * eb)) - (b * b) * INV_2SIG2
    kl = n_tot * LOG_SIGMA_PRIOR - (jnp.sum(kw) + jnp.sum(kb))

    # Weights are pre-transposed in the wrapper: plain x @ W, no XLU transpose.
    y = jnp.dot(x, w, preferred_element_type=jnp.float32) + b
    return y, kl


def bayes_mlp_kernel(x_ref, w1_ref, b1_ref, w2_ref, b2_ref, w3_ref, b3_ref,
                     out_ref, kl_ref):
    h1, kl1 = _bayes_layer(x_ref[...], w1_ref, b1_ref)
    h1 = jnp.maximum(h1, 0.0)                                  # F.relu
    h2, kl2 = _bayes_layer(h1, w2_ref, b2_ref)
    h2 = jnp.maximum(h2, 0.0)                                  # F.relu
    h3, kl3 = _bayes_layer(h2, w3_ref, b3_ref)
    out_ref[...] = h3.astype(out_ref.dtype)
    kl_ref[0, 0] = (kl1 + kl2 + kl3).astype(kl_ref.dtype)


def bayes_mlp_forward(x, params, eps):
    """params/eps: lists of 3 dicts.

    params[i]: 'w_mu','w_rho' shaped (out,in) and 'b_mu','b_rho' shaped (out,)
    eps[i]:    'w' shaped (out,in) and 'b' shaped (out,)
    Returns (logits, kl).
    """
    packed = []
    for p, e in zip(params, eps):
        # (3, in, out): pre-transposed so the kernel contracts (1, 0) directly.
        w_pack = jnp.stack([p["w_mu"].T, p["w_rho"].T, e["w"].T], axis=0)
        # (3, out): all bias-sized vectors of the layer in one tile.
        b_pack = jnp.stack([p["b_mu"].reshape(-1), p["b_rho"].reshape(-1),
                            e["b"].reshape(-1)], axis=0)
        packed += [w_pack, b_pack]

    B = x.shape[0]
    out_dim = params[2]["w_mu"].shape[0]
    vmem = pl.BlockSpec(memory_space=pltpu.MemorySpace.VMEM)
    smem = pl.BlockSpec(memory_space=pltpu.MemorySpace.SMEM)

    out, kl = pl.pallas_call(
        bayes_mlp_kernel,
        out_shape=(jax.ShapeDtypeStruct((B, out_dim), jnp.float32),
                   jax.ShapeDtypeStruct((1, 1), jnp.float32)),
        in_specs=[vmem] * (1 + len(packed)),
        out_specs=(vmem, smem),
        compiler_params=pltpu.CompilerParams(
            vmem_limit_bytes=48 * 1024 * 1024),
    )(x, *packed)
    return out, kl[0, 0]


def _reference_forward(x, params, eps):
    """Pure-JAX reference mirroring the PyTorch module exactly."""
    def layer(x, p, e):
        w_sigma = jnp.log(1.0 + jnp.exp(p["w_rho"]))
        b_sigma = jnp.log(1.0 + jnp.exp(p["b_rho"]))
        w = p["w_mu"] + w_sigma * e["w"]
        b = p["b_mu"] + b_sigma * e["b"]
        log_p = jnp.sum(LOG_P_CONST - w ** 2 / (2.0 * SIGMA_PRIOR ** 2)) \
              + jnp.sum(LOG_P_CONST - b ** 2 / (2.0 * SIGMA_PRIOR ** 2))
        log_q = jnp.sum(LOG_C - p["w_rho"] - (w - p["w_mu"]) ** 2
                        / (2.0 * jnp.exp(p["w_rho"]) ** 2)) \
              + jnp.sum(LOG_C - p["b_rho"] - (b - p["b_mu"]) ** 2
                        / (2.0 * jnp.exp(p["b_rho"]) ** 2))
        return x @ w.T + b, log_q - log_p

    h1, kl1 = layer(x, params[0], eps[0]); h1 = jnp.maximum(h1, 0.0)
    h2, kl2 = layer(h1, params[1], eps[1]); h2 = jnp.maximum(h2, 0.0)
    h3, kl3 = layer(h2, params[2], eps[2])
    return h3, kl1 + kl2 + kl3


if __name__ == "__main__":
    # Small shapes consistent with BayesMLP(input_size, hidden_dim, output_size)
    B, INPUT_SIZE, HIDDEN, OUTPUT_SIZE = 2, 32, 32, 10

    key = jax.random.PRNGKey(0)
    dims = [(HIDDEN, INPUT_SIZE), (HIDDEN, HIDDEN), (OUTPUT_SIZE, HIDDEN)]

    params, eps = [], []
    for (out_f, in_f) in dims:
        key, k1, k2, k3, k4, k5, k6 = jax.random.split(key, 7)
        params.append({
            "w_mu":  0.05 * jax.random.normal(k1, (out_f, in_f), jnp.float32),
            "w_rho": 0.05 * jax.random.normal(k2, (out_f, in_f), jnp.float32),
            "b_mu":  0.05 * jax.random.normal(k3, (out_f,), jnp.float32),
            "b_rho": 0.05 * jax.random.normal(k4, (out_f,), jnp.float32),
        })
        eps.append({
            "w": SIGMA_PRIOR * jax.random.normal(k5, (out_f, in_f), jnp.float32),
            "b": SIGMA_PRIOR * jax.random.normal(k6, (out_f,), jnp.float32),
        })

    key, kx = jax.random.split(key)
    x = jax.random.normal(kx, (B, INPUT_SIZE), jnp.float32)

    out, kl = bayes_mlp_forward(x, params, eps)
    out = jax.block_until_ready(out)
    kl = jax.block_until_ready(kl)

    ref_out, ref_kl = _reference_forward(x, params, eps)
    np.testing.assert_allclose(np.asarray(out), np.asarray(ref_out),
                               rtol=1e-4, atol=1e-4)
    np.testing.assert_allclose(float(kl), float(ref_kl), rtol=1e-3, atol=1e-2)

    print("KERNEL_OK")
</pallas_src>

<mosaic_0001>
module attributes {stable_mosaic.version = 11 : i64} {
  func.func @bayes_mlp_kernel(%arg0: memref<2x32xf32, #tpu.memory_space<vmem>>, %arg1: memref<3x32x32xf32, #tpu.memory_space<vmem>>, %arg2: memref<3x32xf32, #tpu.memory_space<vmem>>, %arg3: memref<3x32x32xf32, #tpu.memory_space<vmem>>, %arg4: memref<3x32xf32, #tpu.memory_space<vmem>>, %arg5: memref<3x32x10xf32, #tpu.memory_space<vmem>>, %arg6: memref<3x10xf32, #tpu.memory_space<vmem>>, %arg7: memref<2x10xf32, #tpu.memory_space<vmem>>, %arg8: memref<1x1xf32, #tpu.memory_space<smem>>) attributes {dimension_semantics = [], scalar_prefetch = 0 : i64, scratch_operands = 0 : i64, tpu.core_type = #tpu.core_type<tc>} {
    %c0 = arith.constant 0 : index
    %c0_0 = arith.constant 0 : index
    %0 = vector.load %arg0[%c0, %c0_0] : memref<2x32xf32, #tpu.memory_space<vmem>>, vector<2x32xf32>
    %c0_1 = arith.constant 0 : index
    %c0_2 = arith.constant 0 : index
    %c0_3 = arith.constant 0 : index
    %1 = vector.load %arg1[%c0_1, %c0_2, %c0_3] : memref<3x32x32xf32, #tpu.memory_space<vmem>>, vector<1x32x32xf32>
    %2 = vector.shape_cast %1 : vector<1x32x32xf32> to vector<32x32xf32>
    %c1 = arith.constant 1 : index
    %c0_4 = arith.constant 0 : index
    %c0_5 = arith.constant 0 : index
    %3 = vector.load %arg1[%c1, %c0_4, %c0_5] : memref<3x32x32xf32, #tpu.memory_space<vmem>>, vector<1x32x32xf32>
    %4 = vector.shape_cast %3 : vector<1x32x32xf32> to vector<32x32xf32>
    %c2 = arith.constant 2 : index
    %c0_6 = arith.constant 0 : index
    %c0_7 = arith.constant 0 : index
    %5 = vector.load %arg1[%c2, %c0_6, %c0_7] : memref<3x32x32xf32, #tpu.memory_space<vmem>>, vector<1x32x32xf32>
    %6 = vector.shape_cast %5 : vector<1x32x32xf32> to vector<32x32xf32>
    %c0_8 = arith.constant 0 : index
    %c0_9 = arith.constant 0 : index
    %7 = vector.load %arg2[%c0_8, %c0_9] : memref<3x32xf32, #tpu.memory_space<vmem>>, vector<1x32xf32>
    %c1_10 = arith.constant 1 : index
    %c0_11 = arith.constant 0 : index
    %8 = vector.load %arg2[%c1_10, %c0_11] : memref<3x32xf32, #tpu.memory_space<vmem>>, vector<1x32xf32>
    %c2_12 = arith.constant 2 : index
    %c0_13 = arith.constant 0 : index
    %9 = vector.load %arg2[%c2_12, %c0_13] : memref<3x32xf32, #tpu.memory_space<vmem>>, vector<1x32xf32>
    %10 = math.exp %4 : vector<32x32xf32>
    %11 = math.exp %8 : vector<1x32xf32>
    %cst = arith.constant 2.000000e+01 : f32
    %12 = vector.broadcast %cst : f32 to vector<32x32xf32>
    %13 = arith.cmpf ogt, %4, %12 : vector<32x32xf32>
    %14 = math.log1p %10 : vector<32x32xf32>
    %15 = arith.select %13, %4, %14 : vector<32x32xi1>, vector<32x32xf32>
    %cst_14 = arith.constant 2.000000e+01 : f32
    %16 = vector.broadcast %cst_14 : f32 to vector<1x32xf32>
    %17 = arith.cmpf ogt, %8, %16 : vector<1x32xf32>
    %18 = math.log1p %11 : vector<1x32xf32>
    %19 = arith.select %17, %8, %18 : vector<1x32xi1>, vector<1x32xf32>
    %20 = arith.mulf %15, %6 : vector<32x32xf32>
    %21 = arith.mulf %19, %9 : vector<1x32xf32>
    %22 = arith.addf %2, %20 : vector<32x32xf32>
    %23 = arith.addf %7, %21 : vector<1x32xf32>
    %24 = arith.mulf %20, %20 : vector<32x32xf32>
    %25 = arith.mulf %10, %10 : vector<32x32xf32>
    %cst_15 = arith.constant 5.000000e-01 : f32
    %26 = vector.broadcast %cst_15 : f32 to vector<32x32xf32>
    %27 = arith.divf %26, %25 : vector<32x32xf32>
    %28 = arith.mulf %24, %27 : vector<32x32xf32>
    %29 = arith.addf %4, %28 : vector<32x32xf32>
    %30 = arith.mulf %22, %22 : vector<32x32xf32>
    %cst_16 = arith.constant 201.714401 : f32
    %31 = vector.broadcast %cst_16 : f32 to vector<32x32xf32>
    %32 = arith.mulf %30, %31 : vector<32x32xf32>
    %33 = arith.subf %29, %32 : vector<32x32xf32>
    %34 = arith.mulf %21, %21 : vector<1x32xf32>
    %35 = arith.mulf %11, %11 : vector<1x32xf32>
    %cst_17 = arith.constant 5.000000e-01 : f32
    %36 = vector.broadcast %cst_17 : f32 to vector<1x32xf32>
    %37 = arith.divf %36, %35 : vector<1x32xf32>
    %38 = arith.mulf %34, %37 : vector<1x32xf32>
    %39 = arith.addf %8, %38 : vector<1x32xf32>
    %40 = arith.mulf %23, %23 : vector<1x32xf32>
    %cst_18 = arith.constant 201.714401 : f32
    %41 = vector.broadcast %cst_18 : f32 to vector<1x32xf32>
    %42 = arith.mulf %40, %41 : vector<1x32xf32>
    %43 = arith.subf %39, %42 : vector<1x32xf32>
    %44 = vector.shape_cast %33 : vector<32x32xf32> to vector<1x32x32xf32>
    %cst_19 = arith.constant dense<0.000000e+00> : vector<1xf32>
    %45 = vector.multi_reduction <add>, %44, %cst_19 [1, 2] : vector<1x32x32xf32> to vector<1xf32>
    %46 = vector.shape_cast %45 : vector<1xf32> to vector<1x1x1xf32>
    %47 = vector.extract %46[0, 0, 0] : f32 from vector<1x1x1xf32>
    %48 = vector.shape_cast %43 : vector<1x32xf32> to vector<1x1x32xf32>
    %cst_20 = arith.constant dense<0.000000e+00> : vector<1xf32>
    %49 = vector.multi_reduction <add>, %48, %cst_20 [1, 2] : vector<1x1x32xf32> to vector<1xf32>
    %50 = vector.shape_cast %49 : vector<1xf32> to vector<1x1x1xf32>
    %51 = vector.extract %50[0, 0, 0] : f32 from vector<1x1x1xf32>
    %52 = arith.addf %47, %51 : f32
    %cst_21 = arith.constant -3.168000e+03 : f32
    %53 = arith.subf %cst_21, %52 : f32
    %cst_22 = arith.constant dense<0.000000e+00> : vector<2x32xf32>
    %54 = tpu.matmul %0, %22, %cst_22 {dimension_numbers = #tpu.dot_dimension_numbers<[1], [0], [0], [1], [0, 0, 1, 1], [], []>} : vector<2x32xf32>, vector<32x32xf32>, vector<2x32xf32> -> vector<2x32xf32>
    %55 = vector.broadcast %23 : vector<1x32xf32> to vector<2x32xf32>
    %56 = arith.addf %54, %55 : vector<2x32xf32>
    %cst_23 = arith.constant 0.000000e+00 : f32
    %57 = vector.broadcast %cst_23 : f32 to vector<2x32xf32>
    %58 = arith.maximumf %56, %57 : vector<2x32xf32>
    %c0_24 = arith.constant 0 : index
    %c0_25 = arith.constant 0 : index
    %c0_26 = arith.constant 0 : index
    %59 = vector.load %arg3[%c0_24, %c0_25, %c0_26] : memref<3x32x32xf32, #tpu.memory_space<vmem>>, vector<1x32x32xf32>
    %60 = vector.shape_cast %59 : vector<1x32x32xf32> to vector<32x32xf32>
    %c1_27 = arith.constant 1 : index
    %c0_28 = arith.constant 0 : index
    %c0_29 = arith.constant 0 : index
    %61 = vector.load %arg3[%c1_27, %c0_28, %c0_29] : memref<3x32x32xf32, #tpu.memory_space<vmem>>, vector<1x32x32xf32>
    %62 = vector.shape_cast %61 : vector<1x32x32xf32> to vector<32x32xf32>
    %c2_30 = arith.constant 2 : index
    %c0_31 = arith.constant 0 : index
    %c0_32 = arith.constant 0 : index
    %63 = vector.load %arg3[%c2_30, %c0_31, %c0_32] : memref<3x32x32xf32, #tpu.memory_space<vmem>>, vector<1x32x32xf32>
    %64 = vector.shape_cast %63 : vector<1x32x32xf32> to vector<32x32xf32>
    %c0_33 = arith.constant 0 : index
    %c0_34 = arith.constant 0 : index
    %65 = vector.load %arg4[%c0_33, %c0_34] : memref<3x32xf32, #tpu.memory_space<vmem>>, vector<1x32xf32>
    %c1_35 = arith.constant 1 : index
    %c0_36 = arith.constant 0 : index
    %66 = vector.load %arg4[%c1_35, %c0_36] : memref<3x32xf32, #tpu.memory_space<vmem>>, vector<1x32xf32>
    %c2_37 = arith.constant 2 : index
    %c0_38 = arith.constant 0 : index
    %67 = vector.load %arg4[%c2_37, %c0_38] : memref<3x32xf32, #tpu.memory_space<vmem>>, vector<1x32xf32>
    %68 = math.exp %62 : vector<32x32xf32>
    %69 = math.exp %66 : vector<1x32xf32>
    %cst_39 = arith.constant 2.000000e+01 : f32
    %70 = vector.broadcast %cst_39 : f32 to vector<32x32xf32>
    %71 = arith.cmpf ogt, %62, %70 : vector<32x32xf32>
    %72 = math.log1p %68 : vector<32x32xf32>
    %73 = arith.select %71, %62, %72 : vector<32x32xi1>, vector<32x32xf32>
    %cst_40 = arith.constant 2.000000e+01 : f32
    %74 = vector.broadcast %cst_40 : f32 to vector<1x32xf32>
    %75 = arith.cmpf ogt, %66, %74 : vector<1x32xf32>
    %76 = math.log1p %69 : vector<1x32xf32>
    %77 = arith.select %75, %66, %76 : vector<1x32xi1>, vector<1x32xf32>
    %78 = arith.mulf %73, %64 : vector<32x32xf32>
    %79 = arith.mulf %77, %67 : vector<1x32xf32>
    %80 = arith.addf %60, %78 : vector<32x32xf32>
    %81 = arith.addf %65, %79 : vector<1x32xf32>
    %82 = arith.mulf %78, %78 : vector<32x32xf32>
    %83 = arith.mulf %68, %68 : vector<32x32xf32>
    %cst_41 = arith.constant 5.000000e-01 : f32
    %84 = vector.broadcast %cst_41 : f32 to vector<32x32xf32>
    %85 = arith.divf %84, %83 : vector<32x32xf32>
    %86 = arith.mulf %82, %85 : vector<32x32xf32>
    %87 = arith.addf %62, %86 : vector<32x32xf32>
    %88 = arith.mulf %80, %80 : vector<32x32xf32>
    %cst_42 = arith.constant 201.714401 : f32
    %89 = vector.broadcast %cst_42 : f32 to vector<32x32xf32>
    %90 = arith.mulf %88, %89 : vector<32x32xf32>
    %91 = arith.subf %87, %90 : vector<32x32xf32>
    %92 = arith.mulf %79, %79 : vector<1x32xf32>
    %93 = arith.mulf %69, %69 : vector<1x32xf32>
    %cst_43 = arith.constant 5.000000e-01 : f32
    %94 = vector.broadcast %cst_43 : f32 to vector<1x32xf32>
    %95 = arith.divf %94, %93 : vector<1x32xf32>
    %96 = arith.mulf %92, %95 : vector<1x32xf32>
    %97 = arith.addf %66, %96 : vector<1x32xf32>
    %98 = arith.mulf %81, %81 : vector<1x32xf32>
    %cst_44 = arith.constant 201.714401 : f32
    %99 = vector.broadcast %cst_44 : f32 to vector<1x32xf32>
    %100 = arith.mulf %98, %99 : vector<1x32xf32>
    %101 = arith.subf %97, %100 : vector<1x32xf32>
    %102 = vector.shape_cast %91 : vector<32x32xf32> to vector<1x32x32xf32>
    %cst_45 = arith.constant dense<0.000000e+00> : vector<1xf32>
    %103 = vector.multi_reduction <add>, %102, %cst_45 [1, 2] : vector<1x32x32xf32> to vector<1xf32>
    %104 = vector.shape_cast %103 : vector<1xf32> to vector<1x1x1xf32>
    %105 = vector.extract %104[0, 0, 0] : f32 from vector<1x1x1xf32>
    %106 = vector.shape_cast %101 : vector<1x32xf32> to vector<1x1x32xf32>
    %cst_46 = arith.constant dense<0.000000e+00> : vector<1xf32>
    %107 = vector.multi_reduction <add>, %106, %cst_46 [1, 2] : vector<1x1x32xf32> to vector<1xf32>
    %108 = vector.shape_cast %107 : vector<1xf32> to vector<1x1x1xf32>
    %109 = vector.extract %108[0, 0, 0] : f32 from vector<1x1x1xf32>
    %110 = arith.addf %105, %109 : f32
    %cst_47 = arith.constant -3.168000e+03 : f32
    %111 = arith.subf %cst_47, %110 : f32
    %cst_48 = arith.constant dense<0.000000e+00> : vector<2x32xf32>
    %112 = tpu.matmul %58, %80, %cst_48 {dimension_numbers = #tpu.dot_dimension_numbers<[1], [0], [0], [1], [0, 0, 1, 1], [], []>} : vector<2x32xf32>, vector<32x32xf32>, vector<2x32xf32> -> vector<2x32xf32>
    %113 = vector.broadcast %81 : vector<1x32xf32> to vector<2x32xf32>
    %114 = arith.addf %112, %113 : vector<2x32xf32>
    %cst_49 = arith.constant 0.000000e+00 : f32
    %115 = vector.broadcast %cst_49 : f32 to vector<2x32xf32>
    %116 = arith.maximumf %114, %115 : vector<2x32xf32>
    %c0_50 = arith.constant 0 : index
    %c0_51 = arith.constant 0 : index
    %c0_52 = arith.constant 0 : index
    %117 = vector.load %arg5[%c0_50, %c0_51, %c0_52] : memref<3x32x10xf32, #tpu.memory_space<vmem>>, vector<1x32x10xf32>
    %118 = vector.shape_cast %117 : vector<1x32x10xf32> to vector<32x10xf32>
    %c1_53 = arith.constant 1 : index
    %c0_54 = arith.constant 0 : index
    %c0_55 = arith.constant 0 : index
    %119 = vector.load %arg5[%c1_53, %c0_54, %c0_55] : memref<3x32x10xf32, #tpu.memory_space<vmem>>, vector<1x32x10xf32>
    %120 = vector.shape_cast %119 : vector<1x32x10xf32> to vector<32x10xf32>
    %c2_56 = arith.constant 2 : index
    %c0_57 = arith.constant 0 : index
    %c0_58 = arith.constant 0 : index
    %121 = vector.load %arg5[%c2_56, %c0_57, %c0_58] : memref<3x32x10xf32, #tpu.memory_space<vmem>>, vector<1x32x10xf32>
    %122 = vector.shape_cast %121 : vector<1x32x10xf32> to vector<32x10xf32>
    %c0_59 = arith.constant 0 : index
    %c0_60 = arith.constant 0 : index
    %123 = vector.load %arg6[%c0_59, %c0_60] : memref<3x10xf32, #tpu.memory_space<vmem>>, vector<1x10xf32>
    %c1_61 = arith.constant 1 : index
    %c0_62 = arith.constant 0 : index
    %124 = vector.load %arg6[%c1_61, %c0_62] : memref<3x10xf32, #tpu.memory_space<vmem>>, vector<1x10xf32>
    %c2_63 = arith.constant 2 : index
    %c0_64 = arith.constant 0 : index
    %125 = vector.load %arg6[%c2_63, %c0_64] : memref<3x10xf32, #tpu.memory_space<vmem>>, vector<1x10xf32>
    %126 = math.exp %120 : vector<32x10xf32>
    %127 = math.exp %124 : vector<1x10xf32>
    %cst_65 = arith.constant 2.000000e+01 : f32
    %128 = vector.broadcast %cst_65 : f32 to vector<32x10xf32>
    %129 = arith.cmpf ogt, %120, %128 : vector<32x10xf32>
    %130 = math.log1p %126 : vector<32x10xf32>
    %131 = arith.select %129, %120, %130 : vector<32x10xi1>, vector<32x10xf32>
    %cst_66 = arith.constant 2.000000e+01 : f32
    %132 = vector.broadcast %cst_66 : f32 to vector<1x10xf32>
    %133 = arith.cmpf ogt, %124, %132 : vector<1x10xf32>
    %134 = math.log1p %127 : vector<1x10xf32>
    %135 = arith.select %133, %124, %134 : vector<1x10xi1>, vector<1x10xf32>
    %136 = arith.mulf %131, %122 : vector<32x10xf32>
    %137 = arith.mulf %135, %125 : vector<1x10xf32>
    %138 = arith.addf %118, %136 : vector<32x10xf32>
    %139 = arith.addf %123, %137 : vector<1x10xf32>
    %140 = arith.mulf %136, %136 : vector<32x10xf32>
    %141 = arith.mulf %126, %126 : vector<32x10xf32>
    %cst_67 = arith.constant 5.000000e-01 : f32
    %142 = vector.broadcast %cst_67 : f32 to vector<32x10xf32>
    %143 = arith.divf %142, %141 : vector<32x10xf32>
    %144 = arith.mulf %140, %143 : vector<32x10xf32>
    %145 = arith.addf %120, %144 : vector<32x10xf32>
    %146 = arith.mulf %138, %138 : vector<32x10xf32>
    %cst_68 = arith.constant 201.714401 : f32
    %147 = vector.broadcast %cst_68 : f32 to vector<32x10xf32>
    %148 = arith.mulf %146, %147 : vector<32x10xf32>
    %149 = arith.subf %145, %148 : vector<32x10xf32>
    %150 = arith.mulf %137, %137 : vector<1x10xf32>
    %151 = arith.mulf %127, %127 : vector<1x10xf32>
    %cst_69 = arith.constant 5.000000e-01 : f32
    %152 = vector.broadcast %cst_69 : f32 to vector<1x10xf32>
    %153 = arith.divf %152, %151 : vector<1x10xf32>
    %154 = arith.mulf %150, %153 : vector<1x10xf32>
    %155 = arith.addf %124, %154 : vector<1x10xf32>
    %156 = arith.mulf %139, %139 : vector<1x10xf32>
    %cst_70 = arith.constant 201.714401 : f32
    %157 = vector.broadcast %cst_70 : f32 to vector<1x10xf32>
    %158 = arith.mulf %156, %157 : vector<1x10xf32>
    %159 = arith.subf %155, %158 : vector<1x10xf32>
    %160 = vector.shape_cast %149 : vector<32x10xf32> to vector<1x32x10xf32>
    %cst_71 = arith.constant dense<0.000000e+00> : vector<1xf32>
    %161 = vector.multi_reduction <add>, %160, %cst_71 [1, 2] : vector<1x32x10xf32> to vector<1xf32>
    %162 = vector.shape_cast %161 : vector<1xf32> to vector<1x1x1xf32>
    %163 = vector.extract %162[0, 0, 0] : f32 from vector<1x1x1xf32>
    %164 = vector.shape_cast %159 : vector<1x10xf32> to vector<1x1x10xf32>
    %cst_72 = arith.constant dense<0.000000e+00> : vector<1xf32>
    %165 = vector.multi_reduction <add>, %164, %cst_72 [1, 2] : vector<1x1x10xf32> to vector<1xf32>
    %166 = vector.shape_cast %165 : vector<1xf32> to vector<1x1x1xf32>
    %167 = vector.extract %166[0, 0, 0] : f32 from vector<1x1x1xf32>
    %168 = arith.addf %163, %167 : f32
    %cst_73 = arith.constant -9.900000e+02 : f32
    %169 = arith.subf %cst_73, %168 : f32
    %cst_74 = arith.constant dense<0.000000e+00> : vector<2x10xf32>
    %170 = tpu.matmul %116, %138, %cst_74 {dimension_numbers = #tpu.dot_dimension_numbers<[1], [0], [0], [1], [0, 0, 1, 1], [], []>} : vector<2x32xf32>, vector<32x10xf32>, vector<2x10xf32> -> vector<2x10xf32>
    %171 = vector.broadcast %139 : vector<1x10xf32> to vector<2x10xf32>
    %172 = arith.addf %170, %171 : vector<2x10xf32>
    %c0_75 = arith.constant 0 : index
    %c0_76 = arith.constant 0 : index
    %173 = vector.load %arg7[%c0_75, %c0_76] : memref<2x10xf32, #tpu.memory_space<vmem>>, vector<2x10xf32>
    tpu.vector_store %arg7[%c0_75, %c0_76], %172 {strides = array<i32>} : memref<2x10xf32, #tpu.memory_space<vmem>>, vector<2x10xf32>,
    %174 = arith.addf %53, %111 : f32
    %175 = arith.addf %174, %169 : f32
    %c0_77 = arith.constant 0 : index
    %c0_78 = arith.constant 0 : index
    %176 = memref.load %arg8[%c0_77, %c0_78] : memref<1x1xf32, #tpu.memory_space<smem>>
    memref.store %175, %arg8[%c0_77, %c0_78] : memref<1x1xf32, #tpu.memory_space<smem>>
    return
  }
}

</mosaic_0001>

<llo_original>
// kernel: tpu_custom_call.1
$region0: #{tpu_custom_call.1}
  #allocation0 [shape = 'u32[]', space=smem, size = 0x4, offset = 0x4, fixed_abs, tag = 'smem constant byte address 0x4 - core index']
  #allocation1 [shape = 'u32[144,128]{1,0:T(1,128)}', space=vmem, size = 0x12000, scoped, tag = 'internal scratch']
  %s0 = inlined_call_operand.vmem [shape: f32[2,32], index: 0, kind: input, shape index: {}]
  %s1 = inlined_call_operand.vmem [shape: f32[3,32,32], index: 1, kind: input, shape index: {}]
  %s2 = inlined_call_operand.vmem [shape: f32[3,32], index: 2, kind: input, shape index: {}]
  %s3 = inlined_call_operand.hbm [shape: f32[3,32,32], index: 3, kind: input, shape index: {}]
  %s4 = inlined_call_operand.vmem [shape: f32[3,32], index: 4, kind: input, shape index: {}]
  %s5 = inlined_call_operand.vmem [shape: f32[3,32,10], index: 5, kind: input, shape index: {}]
  %s6 = inlined_call_operand.vmem [shape: f32[3,10], index: 6, kind: input, shape index: {}]
  %s7 = inlined_call_operand.hbm [shape: f32[2,10], index: 7, kind: output, shape index: {0}]
  %s8 = inlined_call_operand.hbm [shape: f32[1,1], index: 8, kind: output, shape index: {1}]
  %9 = xla_tuple %s7, %s8
  %s10 = sld [smem:[#allocation0]]
  $region50: #{tpu_custom_call.1} parent=0
    _
  %s12 = ssub.s32 1, %s10
  %s13 = scalar_select 0, %s12, %s10
  $region1: #{tpu_custom_call.1} parent=0
    #allocation2 [shape = 'u8[49152]{0}', space=vmem, size = 0xc000, scoped, tag = 'input window, operand 3, single buffered']
    #allocation3 [shape = 's32[1]{0}', space=sflag, size = 0x4, scoped, tag = 'scoped memory for tpu_custom_call.1']
    #allocation4 [shape = 's32[1]{0}', space=sflag, size = 0x4, scoped, tag = 'scoped memory for tpu_custom_call.1']
    #allocation5 [shape = 's32[1]{0}', space=sflag, size = 0x4, scoped, tag = 'scoped memory for tpu_custom_call.1']
    #allocation6 [shape = 'u8[1024]{0}', space=vmem, size = 0x400, scoped, tag = 'output window, operand 0, single buffered']
    #allocation7 [shape = 'u8[512]{0}', space=smem, size = 0x200, scoped, tag = 'output window, operand 1, single buffered']
    %14 = vsyncpa [#allocation3], 0
    %15 = vsyncpa [#allocation4], 0
    %16 = vsyncpa [#allocation5], 0
    // Predicated region
    $region2: #{tpu_custom_call.1} parent=1 // pred_check
      _
    $region3: #{tpu_custom_call.1} parent=1 // pred_check_branch
      %18 = sbr.rel (0) target = $region5
    $region4: #{tpu_custom_call.1} parent=1 // pred_region
      _
    $region5: #{tpu_custom_call.1} parent=1 // pred_fallthru
      _
    // Predicated region
    $region6: #{tpu_custom_call.1} parent=1 // pred_check
      _
    $region7: #{tpu_custom_call.1} parent=1 // pred_check_branch
      %20 = sbr.rel (0) target = $region9
    $region8: #{tpu_custom_call.1} parent=1 // pred_region
      _
    $region9: #{tpu_custom_call.1} parent=1 // pred_fallthru
      _
    // Predicated region
    $region10: #{tpu_custom_call.1} parent=1 // pred_check
      _
    $region11: #{tpu_custom_call.1} parent=1 // pred_check_branch
      %22 = sbr.rel (0) target = $region13
    $region12: #{tpu_custom_call.1} parent=1 // pred_region
      _
    $region13: #{tpu_custom_call.1} parent=1 // pred_fallthru
      _
    // Predicated region
    $region14: #{tpu_custom_call.1} parent=1 // pred_check
      _
    $region15: #{tpu_custom_call.1} parent=1 // pred_check_branch
      %24 = sbr.rel (0) target = $region17
    $region16: #{tpu_custom_call.1} parent=1 // pred_region
      %s26 = ssub.s32 1536, 1536
      %27 = vsyncadd [#allocation3], %s26
      %s28 = sshll.u32 [#allocation2], 4
      %s29 = int_to_ptr.vmem [resolvable:$true] %s28
      %34 = dma.hbm_to_vmem [thread:$0]  %s3, 1536, %s29, [#allocation3], 128, 128, 8
    $region17: #{tpu_custom_call.1} parent=1 // pred_fallthru
      _
    // Predicated region
    $region18: #{tpu_custom_call.1} parent=1 // pred_check
      _
    $region19: #{tpu_custom_call.1} parent=1 // pred_check_branch
      %36 = sbr.rel (0) target = $region21
    $region20: #{tpu_custom_call.1} parent=1 // pred_region
      _
    $region21: #{tpu_custom_call.1} parent=1 // pred_fallthru
      _
    // Predicated region
    $region22: #{tpu_custom_call.1} parent=1 // pred_check
      _
    $region23: #{tpu_custom_call.1} parent=1 // pred_check_branch
      %38 = sbr.rel (0) target = $region25
    $region24: #{tpu_custom_call.1} parent=1 // pred_region
      _
    $region25: #{tpu_custom_call.1} parent=1 // pred_fallthru
      _
    // Predicated region
    $region26: #{tpu_custom_call.1} parent=1 // pred_check
      _
    $region27: #{tpu_custom_call.1} parent=1 // pred_check_branch
      %40 = sbr.rel (0) target = $region29
    $region28: #{tpu_custom_call.1} parent=1 // pred_region
      _
    $region29: #{tpu_custom_call.1} parent=1 // pred_fallthru
      _
    // Predicated region
    $region30: #{tpu_custom_call.1} parent=1 // pred_check
      _
    $region31: #{tpu_custom_call.1} parent=1 // pred_check_branch
      %42 = sbr.rel (0) target = $region33
    $region32: #{tpu_custom_call.1} parent=1 // pred_region
      %43 = dma.done [#allocation3], 1536
    $region33: #{tpu_custom_call.1} parent=1 // pred_fallthru
      _
    %v44 = vld [vmem:[%s0] sm:$0x3]
    %v45 = vld [vmem:[%s1] sm:$0xff]
    %v46 = vld [vmem:[%s1 + $0x8] sm:$0xff]
    %v47 = vld [vmem:[%s1 + $0x10] sm:$0xff]
    %v48 = vld [vmem:[%s1 + $0x18] sm:$0xff]
    %s49 = scalar_lea.vmem %s1, 32
    %v50 = vld [vmem:[%s49] sm:$0xff]
    %v51 = vld [vmem:[%s49 + $0x8] sm:$0xff]
    %v52 = vld [vmem:[%s49 + $0x10] sm:$0xff]
    %v53 = vld [vmem:[%s49 + $0x18] sm:$0xff]
    %s54 = scalar_lea.vmem %s1, 64
    %v55 = vld [vmem:[%s54] sm:$0xff]
    %v56 = vld [vmem:[%s54 + $0x8] sm:$0xff]
    %v57 = vld [vmem:[%s54 + $0x10] sm:$0xff]
    %v58 = vld [vmem:[%s54 + $0x18] sm:$0xff]
    %v59 = vld [vmem:[%s2] sm:$0x1]
    %v60 = vld [vmem:[%s2 + $0x1] sm:$0x1]
    %v61 = vld [vmem:[%s2 + $0x2] sm:$0x1]
    %v62 = vmul.f32 %v50, 1.442695
    %v63 = vpow.pop %v62
    %v64 = vmul.f32 %v51, 1.442695
    %v65 = vpow.pop %v64
    %v66 = vmul.f32 %v52, 1.442695
    %v67 = vpow.pop %v66
    %v68 = vmul.f32 %v53, 1.442695
    %v69 = vpow.pop %v68
    %v70 = vmul.f32 %v60, 1.442695
    %v71 = vpow.pop %v70
    %vm72 = vcmp.gt.f32.partialorder %v50, 20.0
    %vm73 = vcmp.gt.f32.partialorder %v51, 20.0
    %vm74 = vcmp.gt.f32.partialorder %v52, 20.0
    %vm75 = vcmp.gt.f32.partialorder %v53, 20.0
    %v76 = vadd.f32 %v63, 1.0
    %v77 = vlog2.pop %v76
    %v78 = vmul.f32 %v77, 0.6931472
    %v79 = vmul.f32 -0.5, %v63
    %v80 = vadd.f32 %v79, 1.0
    %v81 = vmul.f32 %v80, %v63
    %v82 = vand.u32 2147483647, %v63
    %vm83 = vcmp.lt.f32.partialorder %v82, 0.0004427343
    %v84 = vsel %vm83, %v81, %v78
    %v85 = vadd.f32 %v65, 1.0
    %v86 = vlog2.pop %v85
    %v87 = vmul.f32 %v86, 0.6931472
    %v88 = vmul.f32 -0.5, %v65
    %v89 = vadd.f32 %v88, 1.0
    %v90 = vmul.f32 %v89, %v65
    %v91 = vand.u32 2147483647, %v65
    %vm92 = vcmp.lt.f32.partialorder %v91, 0.0004427343
    %v93 = vsel %vm92, %v90, %v87
    %v94 = vadd.f32 %v67, 1.0
    %v95 = vlog2.pop %v94
    %v96 = vmul.f32 %v95, 0.6931472
    %v97 = vmul.f32 -0.5, %v67
    %v98 = vadd.f32 %v97, 1.0
    %v99 = vmul.f32 %v98, %v67
    %v100 = vand.u32 2147483647, %v67
    %vm101 = vcmp.lt.f32.partialorder %v100, 0.0004427343
    %v102 = vsel %vm101, %v99, %v96
    %v103 = vadd.f32 %v69, 1.0
    %v104 = vlog2.pop %v103
    %v105 = vmul.f32 %v104, 0.6931472
    %v106 = vmul.f32 -0.5, %v69
    %v107 = vadd.f32 %v106, 1.0
    %v108 = vmul.f32 %v107, %v69
    %v109 = vand.u32 2147483647, %v69
    %vm110 = vcmp.lt.f32.partialorder %v109, 0.0004427343
    %v111 = vsel %vm110, %v108, %v105
    %v112 = vsel %vm72, %v50, %v84
    %v113 = vsel %vm73, %v51, %v93
    %v114 = vsel %vm74, %v52, %v102
    %v115 = vsel %vm75, %v53, %v111
    %vm116 = vcmp.gt.f32.partialorder %v60, 20.0
    %v117 = vadd.f32 %v71, 1.0
    %v118 = vlog2.pop %v117
    %v119 = vmul.f32 %v118, 0.6931472
    %v120 = vmul.f32 -0.5, %v71
    %v121 = vadd.f32 %v120, 1.0
    %v122 = vmul.f32 %v121, %v71
    %v123 = vand.u32 2147483647, %v71
    %vm124 = vcmp.lt.f32.partialorder %v123, 0.0004427343
    %v125 = vsel %vm124, %v122, %v119
    %v126 = vsel %vm116, %v60, %v125
    %v127 = vmul.f32 %v112, %v55
    %v128 = vmul.f32 %v113, %v56
    %v129 = vmul.f32 %v114, %v57
    %v130 = vmul.f32 %v115, %v58
    %v131 = vmul.f32 %v126, %v61
    %v132 = vadd.f32 %v45, %v127
    %v133 = vadd.f32 %v46, %v128
    %v134 = vadd.f32 %v47, %v129
    %v135 = vadd.f32 %v48, %v130
    %v136 = vadd.f32 %v59, %v131
    %v137 = vmul.f32 %v127, %v127
    %v138 = vmul.f32 %v128, %v128
    %v139 = vmul.f32 %v129, %v129
    %v140 = vmul.f32 %v130, %v130
    %v141 = vmul.f32 %v63, %v63
    %v142 = vmul.f32 %v65, %v65
    %v143 = vmul.f32 %v67, %v67
    %v144 = vmul.f32 %v69, %v69
    %v145 = vrcp.pop %v141
    %v146 = vmul.f32 0.5, %v145
    %v147 = vrcp.pop %v142
    %v148 = vmul.f32 0.5, %v147
    %v149 = vrcp.pop %v143
    %v150 = vmul.f32 0.5, %v149
    %v151 = vrcp.pop %v144
    %v152 = vmul.f32 0.5, %v151
    %v153 = vmul.f32 %v137, %v146
    %v154 = vmul.f32 %v138, %v148
    %v155 = vmul.f32 %v139, %v150
    %v156 = vmul.f32 %v140, %v152
    %v157 = vadd.f32 %v50, %v153
    %v158 = vadd.f32 %v51, %v154
    %v159 = vadd.f32 %v52, %v155
    %v160 = vadd.f32 %v53, %v156
    %v161 = vmul.f32 %v132, %v132
    %v162 = vmul.f32 %v133, %v133
    %v163 = vmul.f32 %v134, %v134
    %v164 = vmul.f32 %v135, %v135
    %v165 = vmul.f32 %v161, 201.7144
    %v166 = vmul.f32 %v162, 201.7144
    %v167 = vmul.f32 %v163, 201.7144
    %v168 = vmul.f32 %v164, 201.7144
    %v169 = vsub.f32 %v157, %v165
    %v170 = vsub.f32 %v158, %v166
    %v171 = vsub.f32 %v159, %v167
    %v172 = vsub.f32 %v160, %v168
    %v173 = vmul.f32 %v131, %v131
    %v174 = vmul.f32 %v71, %v71
    %v175 = vrcp.pop %v174
    %v176 = vmul.f32 0.5, %v175
    %v177 = vmul.f32 %v173, %v176
    %v178 = vadd.f32 %v60, %v177
    %v179 = vmul.f32 %v136, %v136
    %v180 = vmul.f32 %v179, 201.7144
    %v181 = vsub.f32 %v178, %v180
    %vm182 = vcmask 261120
    %v183 = vsel %vm182, %v169, 0.0
    %v184 = vsel %vm182, %v170, 0.0
    %v185 = vadd.f32 %v183, %v184
    %v186 = vsel %vm182, %v171, 0.0
    %v187 = vadd.f32 %v185, %v186
    %v188 = vsel %vm182, %v172, 0.0
    %v189 = vadd.f32 %v187, %v188
    %190 = vadd.xlane.f32.xlu0 %v189
    %v191 = vpop.xlane.xlu0 %190
    %v192 = vrot.slane %v191, 4
    %v193 = vadd.f32 %v191, %v192
    %v194 = vrot.slane %v193, 2
    %v195 = vadd.f32 %v193, %v194
    %v196 = vrot.slane %v195, 1
    %v197 = vadd.f32 %v195, %v196
    %s198 = vtos %v197
    %vm199 = vcmask 253952
    %v200 = vsel %vm199, %v181, 0.0
    %201 = vadd.xlane.f32.xlu0 %v200
    %v202 = vpop.xlane.xlu0 %201
    %v203 = vrot.slane %v202, 4
    %v204 = vadd.f32 %v202, %v203
    %v205 = vrot.slane %v204, 2
    %v206 = vadd.f32 %v204, %v205
    %v207 = vrot.slane %v206, 1
    %v208 = vadd.f32 %v206, %v207
    %s209 = vtos %v208
    %s210 = sadd.f32 %s198, %s209
    %s211 = ssub.f32 -3168.0, %s210
    %v212 = vlaneseq
    %v213 = vshrl.u32 %v212, 7
    %v214 = vsub.s32 0, %v213
    %v215 = vrot.slane %v136, %v214
    %v217 = vsel %vm182, %v44, 0
    %219 = vmatprep.subr.mxu0 0.0
    %220 = vmatpush1.msra.mxu0 0.0
    %221 = vmatprep.subr.mxu0 0.0
    %222 = vmatpush1.msra.mxu0 0.0
    %223 = vmatprep.subr.mxu0 0.0
    %224 = vmatpush1.msra.mxu0 0.0
    %225 = vmatprep.subr.mxu0 0.0
    %226 = vmatpush1.msra.mxu0 0.0
    %227 = vmatprep.subr.mxu0 0.0
    %228 = vmatpush1.msra.mxu0 0.0
    %229 = vmatprep.subr.mxu0 0.0
    %230 = vmatpush1.msra.mxu0 0.0
    %231 = vmatprep.subr.mxu0 0.0
    %232 = vmatpush1.msra.mxu0 0.0
    %233 = vmatprep.subr.mxu0 0.0
    %234 = vmatpush1.msra.mxu0 0.0
    %235 = vmatprep.subr.mxu0 0.0
    %236 = vmatpush1.msra.mxu0 0.0
    %237 = vmatprep.subr.mxu0 0.0
    %238 = vmatpush1.msra.mxu0 0.0
    %239 = vmatprep.subr.mxu0 0.0
    %240 = vmatpush1.msra.mxu0 0.0
    %241 = vmatprep.subr.mxu0 0.0
    %242 = vmatpush1.msra.mxu0 0.0
    %243 = vmatprep.subr.mxu0 0.0
    %244 = vmatpush1.msra.mxu0 %v135
    %245 = vmatprep.subr.mxu0 0.0
    %246 = vmatpush1.msra.mxu0 %v134
    %247 = vmatprep.subr.mxu0 0.0
    %248 = vmatpush1.msra.mxu0 %v133
    %249 = vmatprep.subr.mxu0 0.0
    %250 = vmatpush1.msra.mxu0 %v132
    %251 = vmatprep.subr.mxu0 0.0
    %252 = vmatpush2.msra.mxu0 0.0
    %253 = vmatprep.subr.mxu0 0.0
    %254 = vmatpush2.msra.mxu0 0.0
    %255 = vmatprep.subr.mxu0 0.0
    %256 = vmatpush2.msra.mxu0 0.0
    %257 = vmatprep.subr.mxu0 0.0
    %258 = vmatpush2.msra.mxu0 0.0
    %259 = vmatprep.subr.mxu0 0.0
    %260 = vmatpush2.msra.mxu0 0.0
    %261 = vmatprep.subr.mxu0 0.0
    %262 = vmatpush2.msra.mxu0 0.0
    %263 = vmatprep.subr.mxu0 0.0
    %264 = vmatpush2.msra.mxu0 0.0
    %265 = vmatprep.subr.mxu0 0.0
    %266 = vmatpush2.msra.mxu0 0.0
    %267 = vmatprep.subr.mxu0 0.0
    %268 = vmatpush2.msra.mxu0 0.0
    %269 = vmatprep.subr.mxu0 0.0
    %270 = vmatpush2.msra.mxu0 0.0
    %271 = vmatprep.subr.mxu0 0.0
    %272 = vmatpush2.msra.mxu0 0.0
    %273 = vmatprep.subr.mxu0 0.0
    %274 = vmatpush2.msra.mxu0 0.0
    %275 = vmatprep.subr.mxu0 0.0
    %276 = vmatpush2.msra.mxu0 0.0
    %277 = vmatprep.subr.mxu0 0.0
    %278 = vmatpush2.msra.mxu0 0.0
    %279 = vmatprep.subr.mxu0 0.0
    %280 = vmatpush2.msra.mxu0 0.0
    %281 = vmatprep.subr.mxu0 0.0
    %282 = vmatpush2.msra.mxu0 0.0
    %283 = vmatprep.mubr.f32.mxu0 0.0
    %284 = vmatmul.mubr.f32.gmra.mxu0 %v217
    %v285 = vpop.f32.mrf.mxu0
    %v286 = vadd.f32 %v215, %v285
    %v287 = vpop.f32.mrf.mxu0
    %288 = vdwg.mxu0
    %v289 = vmax.f32 %v286, 0.0
    %v290 = vld [vmem:[#allocation2] sm:$0xff]
    %v291 = vld [vmem:[#allocation2 + $0x8] sm:$0xff]
    %v292 = vld [vmem:[#allocation2 + $0x10] sm:$0xff]
    %v293 = vld [vmem:[#allocation2 + $0x18] sm:$0xff]
    %s294 = scalar_lea.vmem [#allocation2], 32
    %v295 = vld [vmem:[%s294] sm:$0xff]
    %v296 = vld [vmem:[%s294 + $0x8] sm:$0xff]
    %v297 = vld [vmem:[%s294 + $0x10] sm:$0xff]
    %v298 = vld [vmem:[%s294 + $0x18] sm:$0xff]
    %s299 = scalar_lea.vmem [#allocation2], 64
    %v300 = vld [vmem:[%s299] sm:$0xff]
    %v301 = vld [vmem:[%s299 + $0x8] sm:$0xff]
    %v302 = vld [vmem:[%s299 + $0x10] sm:$0xff]
    %v303 = vld [vmem:[%s299 + $0x18] sm:$0xff]
    %v304 = vld [vmem:[%s4] sm:$0x1]
    %v305 = vld [vmem:[%s4 + $0x1] sm:$0x1]
    %v306 = vld [vmem:[%s4 + $0x2] sm:$0x1]
    %v307 = vmul.f32 %v295, 1.442695
    %v308 = vpow.pop %v307
    %v309 = vmul.f32 %v296, 1.442695
    %v310 = vpow.pop %v309
    %v311 = vmul.f32 %v297, 1.442695
    %v312 = vpow.pop %v311
    %v313 = vmul.f32 %v298, 1.442695
    %v314 = vpow.pop %v313
    %v315 = vmul.f32 %v305, 1.442695
    %v316 = vpow.pop %v315
    %vm317 = vcmp.gt.f32.partialorder %v295, 20.0
    %vm318 = vcmp.gt.f32.partialorder %v296, 20.0
    %vm319 = vcmp.gt.f32.partialorder %v297, 20.0
    %vm320 = vcmp.gt.f32.partialorder %v298, 20.0
    %v321 = vadd.f32 %v308, 1.0
    %v322 = vlog2.pop %v321
    %v323 = vmul.f32 %v322, 0.6931472
    %v324 = vmul.f32 -0.5, %v308
    %v325 = vadd.f32 %v324, 1.0
    %v326 = vmul.f32 %v325, %v308
    %v327 = vand.u32 2147483647, %v308
    %vm328 = vcmp.lt.f32.partialorder %v327, 0.0004427343
    %v329 = vsel %vm328, %v326, %v323
    %v330 = vadd.f32 %v310, 1.0
    %v331 = vlog2.pop %v330
    %v332 = vmul.f32 %v331, 0.6931472
    %v333 = vmul.f32 -0.5, %v310
    %v334 = vadd.f32 %v333, 1.0
    %v335 = vmul.f32 %v334, %v310
    %v336 = vand.u32 2147483647, %v310
    %vm337 = vcmp.lt.f32.partialorder %v336, 0.0004427343
    %v338 = vsel %vm337, %v335, %v332
    %v339 = vadd.f32 %v312, 1.0
    %v340 = vlog2.pop %v339
    %v341 = vmul.f32 %v340, 0.6931472
    %v342 = vmul.f32 -0.5, %v312
    %v343 = vadd.f32 %v342, 1.0
    %v344 = vmul.f32 %v343, %v312
    %v345 = vand.u32 2147483647, %v312
    %vm346 = vcmp.lt.f32.partialorder %v345, 0.0004427343
    %v347 = vsel %vm346, %v344, %v341
    %v348 = vadd.f32 %v314, 1.0
    %v349 = vlog2.pop %v348
    %v350 = vmul.f32 %v349, 0.6931472
    %v351 = vmul.f32 -0.5, %v314
    %v352 = vadd.f32 %v351, 1.0
    %v353 = vmul.f32 %v352, %v314
    %v354 = vand.u32 2147483647, %v314
    %vm355 = vcmp.lt.f32.partialorder %v354, 0.0004427343
    %v356 = vsel %vm355, %v353, %v350
    %v357 = vsel %vm317, %v295, %v329
    %v358 = vsel %vm318, %v296, %v338
    %v359 = vsel %vm319, %v297, %v347
    %v360 = vsel %vm320, %v298, %v356
    %vm361 = vcmp.gt.f32.partialorder %v305, 20.0
    %v362 = vadd.f32 %v316, 1.0
    %v363 = vlog2.pop %v362
    %v364 = vmul.f32 %v363, 0.6931472
    %v365 = vmul.f32 -0.5, %v316
    %v366 = vadd.f32 %v365, 1.0
    %v367 = vmul.f32 %v366, %v316
    %v368 = vand.u32 2147483647, %v316
    %vm369 = vcmp.lt.f32.partialorder %v368, 0.0004427343
    %v370 = vsel %vm369, %v367, %v364
    %v371 = vsel %vm361, %v305, %v370
    %v372 = vmul.f32 %v357, %v300
    %v373 = vmul.f32 %v358, %v301
    %v374 = vmul.f32 %v359, %v302
    %v375 = vmul.f32 %v360, %v303
    %v376 = vmul.f32 %v371, %v306
    %v377 = vadd.f32 %v290, %v372
    %v378 = vadd.f32 %v291, %v373
    %v379 = vadd.f32 %v292, %v374
    %v380 = vadd.f32 %v293, %v375
    %v381 = vadd.f32 %v304, %v376
    %v382 = vmul.f32 %v372, %v372
    %v383 = vmul.f32 %v373, %v373
    %v384 = vmul.f32 %v374, %v374
    %v385 = vmul.f32 %v375, %v375
    %v386 = vmul.f32 %v308, %v308
    %v387 = vmul.f32 %v310, %v310
    %v388 = vmul.f32 %v312, %v312
    %v389 = vmul.f32 %v314, %v314
    %v390 = vrcp.pop %v386
    %v391 = vmul.f32 0.5, %v390
    %v392 = vrcp.pop %v387
    %v393 = vmul.f32 0.5, %v392
    %v394 = vrcp.pop %v388
    %v395 = vmul.f32 0.5, %v394
    %v396 = vrcp.pop %v389
    %v397 = vmul.f32 0.5, %v396
    %v398 = vmul.f32 %v382, %v391
    %v399 = vmul.f32 %v383, %v393
    %v400 = vmul.f32 %v384, %v395
    %v401 = vmul.f32 %v385, %v397
    %v402 = vadd.f32 %v295, %v398
    %v403 = vadd.f32 %v296, %v399
    %v404 = vadd.f32 %v297, %v400
    %v405 = vadd.f32 %v298, %v401
    %v406 = vmul.f32 %v377, %v377
    %v407 = vmul.f32 %v378, %v378
    %v408 = vmul.f32 %v379, %v379
    %v409 = vmul.f32 %v380, %v380
    %v410 = vmul.f32 %v406, 201.7144
    %v411 = vmul.f32 %v407, 201.7144
    %v412 = vmul.f32 %v408, 201.7144
    %v413 = vmul.f32 %v409, 201.7144
    %v414 = vsub.f32 %v402, %v410
    %v415 = vsub.f32 %v403, %v411
    %v416 = vsub.f32 %v404, %v412
    %v417 = vsub.f32 %v405, %v413
    %v418 = vmul.f32 %v376, %v376
    %v419 = vmul.f32 %v316, %v316
    %v420 = vrcp.pop %v419
    %v421 = vmul.f32 0.5, %v420
    %v422 = vmul.f32 %v418, %v421
    %v423 = vadd.f32 %v305, %v422
    %v424 = vmul.f32 %v381, %v381
    %v425 = vmul.f32 %v424, 201.7144
    %v426 = vsub.f32 %v423, %v425
    %v427 = vsel %vm182, %v414, 0.0
    %v428 = vsel %vm182, %v415, 0.0
    %v429 = vadd.f32 %v427, %v428
    %v430 = vsel %vm182, %v416, 0.0
    %v431 = vadd.f32 %v429, %v430
    %v432 = vsel %vm182, %v417, 0.0
    %v433 = vadd.f32 %v431, %v432
    %434 = vadd.xlane.f32.xlu0 %v433
    %v435 = vpop.xlane.xlu0 %434
    %v436 = vrot.slane %v435, 4
    %v437 = vadd.f32 %v435, %v436
    %v438 = vrot.slane %v437, 2
    %v439 = vadd.f32 %v437, %v438
    %v440 = vrot.slane %v439, 1
    %v441 = vadd.f32 %v439, %v440
    %s442 = vtos %v441
    %v443 = vsel %vm199, %v426, 0.0
    %444 = vadd.xlane.f32.xlu0 %v443
    %v445 = vpop.xlane.xlu0 %444
    %v446 = vrot.slane %v445, 4
    %v447 = vadd.f32 %v445, %v446
    %v448 = vrot.slane %v447, 2
    %v449 = vadd.f32 %v447, %v448
    %v450 = vrot.slane %v449, 1
    %v451 = vadd.f32 %v449, %v450
    %s452 = vtos %v451
    %s453 = sadd.f32 %s442, %s452
    %s454 = ssub.f32 -3168.0, %s453
    %v455 = vlaneseq
    %v456 = vshrl.u32 %v455, 7
    %v457 = vsub.s32 0, %v456
    %v458 = vrot.slane %v381, %v457
    %v460 = vsel %vm182, %v289, 0
    %462 = vmatprep.subr.mxu0 0.0
    %463 = vmatpush1.msra.mxu0 0.0
    %464 = vmatprep.subr.mxu0 0.0
    %465 = vmatpush1.msra.mxu0 0.0
    %466 = vmatprep.subr.mxu0 0.0
    %467 = vmatpush1.msra.mxu0 0.0
    %468 = vmatprep.subr.mxu0 0.0
    %469 = vmatpush1.msra.mxu0 0.0
    %470 = vmatprep.subr.mxu0 0.0
    %471 = vmatpush1.msra.mxu0 0.0
    %472 = vmatprep.subr.mxu0 0.0
    %473 = vmatpush1.msra.mxu0 0.0
    %474 = vmatprep.subr.mxu0 0.0
    %475 = vmatpush1.msra.mxu0 0.0
    %476 = vmatprep.subr.mxu0 0.0
    %477 = vmatpush1.msra.mxu0 0.0
    %478 = vmatprep.subr.mxu0 0.0
    %479 = vmatpush1.msra.mxu0 0.0
    %480 = vmatprep.subr.mxu0 0.0
    %481 = vmatpush1.msra.mxu0 0.0
    %482 = vmatprep.subr.mxu0 0.0
    %483 = vmatpush1.msra.mxu0 0.0
    %484 = vmatprep.subr.mxu0 0.0
    %485 = vmatpush1.msra.mxu0 0.0
    %486 = vmatprep.subr.mxu0 0.0
    %487 = vmatpush1.msra.mxu0 %v380
    %488 = vmatprep.subr.mxu0 0.0
    %489 = vmatpush1.msra.mxu0 %v379
    %490 = vmatprep.subr.mxu0 0.0
    %491 = vmatpush1.msra.mxu0 %v378
    %492 = vmatprep.subr.mxu0 0.0
    %493 = vmatpush1.msra.mxu0 %v377
    %494 = vmatprep.subr.mxu0 0.0
    %495 = vmatpush2.msra.mxu0 0.0
    %496 = vmatprep.subr.mxu0 0.0
    %497 = vmatpush2.msra.mxu0 0.0
    %498 = vmatprep.subr.mxu0 0.0
    %499 = vmatpush2.msra.mxu0 0.0
    %500 = vmatprep.subr.mxu0 0.0
    %501 = vmatpush2.msra.mxu0 0.0
    %502 = vmatprep.subr.mxu0 0.0
    %503 = vmatpush2.msra.mxu0 0.0
    %504 = vmatprep.subr.mxu0 0.0
    %505 = vmatpush2.msra.mxu0 0.0
    %506 = vmatprep.subr.mxu0 0.0
    %507 = vmatpush2.msra.mxu0 0.0
    %508 = vmatprep.subr.mxu0 0.0
    %509 = vmatpush2.msra.mxu0 0.0
    %510 = vmatprep.subr.mxu0 0.0
    %511 = vmatpush2.msra.mxu0 0.0
    %512 = vmatprep.subr.mxu0 0.0
    %513 = vmatpush2.msra.mxu0 0.0
    %514 = vmatprep.subr.mxu0 0.0
    %515 = vmatpush2.msra.mxu0 0.0
    %516 = vmatprep.subr.mxu0 0.0
    %517 = vmatpush2.msra.mxu0 0.0
    %518 = vmatprep.subr.mxu0 0.0
    %519 = vmatpush2.msra.mxu0 0.0
    %520 = vmatprep.subr.mxu0 0.0
    %521 = vmatpush2.msra.mxu0 0.0
    %522 = vmatprep.subr.mxu0 0.0
    %523 = vmatpush2.msra.mxu0 0.0
    %524 = vmatprep.subr.mxu0 0.0
    %525 = vmatpush2.msra.mxu0 0.0
    %526 = vmatprep.mubr.f32.mxu0 0.0
    %527 = vmatmul.mubr.f32.gmra.mxu0 %v460
    %v528 = vpop.f32.mrf.mxu0
    %v529 = vadd.f32 %v458, %v528
    %v530 = vpop.f32.mrf.mxu0
    %531 = vdwg.mxu0
    %v532 = vmax.f32 %v529, 0.0
    %v533 = vld [vmem:[%s5] sm:$0xff]
    %v534 = vld [vmem:[%s5 + $0x8] sm:$0xff]
    %v535 = vld [vmem:[%s5 + $0x10] sm:$0xff]
    %v536 = vld [vmem:[%s5 + $0x18] sm:$0xff]
    %s537 = scalar_lea.vmem %s5, 32
    %v538 = vld [vmem:[%s537] sm:$0xff]
    %v539 = vld [vmem:[%s537 + $0x8] sm:$0xff]
    %v540 = vld [vmem:[%s537 + $0x10] sm:$0xff]
    %v541 = vld [vmem:[%s537 + $0x18] sm:$0xff]
    %s542 = scalar_lea.vmem %s5, 64
    %v543 = vld [vmem:[%s542] sm:$0xff]
    %v544 = vld [vmem:[%s542 + $0x8] sm:$0xff]
    %v545 = vld [vmem:[%s542 + $0x10] sm:$0xff]
    %v546 = vld [vmem:[%s542 + $0x18] sm:$0xff]
    %v547 = vld [vmem:[%s6] sm:$0x1]
    %v548 = vld [vmem:[%s6 + $0x1] sm:$0x1]
    %v549 = vld [vmem:[%s6 + $0x2] sm:$0x1]
    %v550 = vmul.f32 %v538, 1.442695
    %v551 = vpow.pop %v550
    %v552 = vmul.f32 %v539, 1.442695
    %v553 = vpow.pop %v552
    %v554 = vmul.f32 %v540, 1.442695
    %v555 = vpow.pop %v554
    %v556 = vmul.f32 %v541, 1.442695
    %v557 = vpow.pop %v556
    %v558 = vmul.f32 %v548, 1.442695
    %v559 = vpow.pop %v558
    %vm560 = vcmp.gt.f32.partialorder %v538, 20.0
    %vm561 = vcmp.gt.f32.partialorder %v539, 20.0
    %vm562 = vcmp.gt.f32.partialorder %v540, 20.0
    %vm563 = vcmp.gt.f32.partialorder %v541, 20.0
    %v564 = vadd.f32 %v551, 1.0
    %v565 = vlog2.pop %v564
    %v566 = vmul.f32 %v565, 0.6931472
    %v567 = vmul.f32 -0.5, %v551
    %v568 = vadd.f32 %v567, 1.0
    %v569 = vmul.f32 %v568, %v551
    %v570 = vand.u32 2147483647, %v551
    %vm571 = vcmp.lt.f32.partialorder %v570, 0.0004427343
    %v572 = vsel %vm571, %v569, %v566
    %v573 = vadd.f32 %v553, 1.0
    %v574 = vlog2.pop %v573
    %v575 = vmul.f32 %v574, 0.6931472
    %v576 = vmul.f32 -0.5, %v553
    %v577 = vadd.f32 %v576, 1.0
    %v578 = vmul.f32 %v577, %v553
    %v579 = vand.u32 2147483647, %v553
    %vm580 = vcmp.lt.f32.partialorder %v579, 0.0004427343
    %v581 = vsel %vm580, %v578, %v575
    %v582 = vadd.f32 %v555, 1.0
    %v583 = vlog2.pop %v582
    %v584 = vmul.f32 %v583, 0.6931472
    %v585 = vmul.f32 -0.5, %v555
    %v586 = vadd.f32 %v585, 1.0
    %v587 = vmul.f32 %v586, %v555
    %v588 = vand.u32 2147483647, %v555
    %vm589 = vcmp.lt.f32.partialorder %v588, 0.0004427343
    %v590 = vsel %vm589, %v587, %v584
    %v591 = vadd.f32 %v557, 1.0
    %v592 = vlog2.pop %v591
    %v593 = vmul.f32 %v592, 0.6931472
    %v594 = vmul.f32 -0.5, %v557
    %v595 = vadd.f32 %v594, 1.0
    %v596 = vmul.f32 %v595, %v557
    %v597 = vand.u32 2147483647, %v557
    %vm598 = vcmp.lt.f32.partialorder %v597, 0.0004427343
    %v599 = vsel %vm598, %v596, %v593
    %v600 = vsel %vm560, %v538, %v572
    %v601 = vsel %vm561, %v539, %v581
    %v602 = vsel %vm562, %v540, %v590
    %v603 = vsel %vm563, %v541, %v599
    %vm604 = vcmp.gt.f32.partialorder %v548, 20.0
    %v605 = vadd.f32 %v559, 1.0
    %v606 = vlog2.pop %v605
    %v607 = vmul.f32 %v606, 0.6931472
    %v608 = vmul.f32 -0.5, %v559
    %v609 = vadd.f32 %v608, 1.0
    %v610 = vmul.f32 %v609, %v559
    %v611 = vand.u32 2147483647, %v559
    %vm612 = vcmp.lt.f32.partialorder %v611, 0.0004427343
    %v613 = vsel %vm612, %v610, %v607
    %v614 = vsel %vm604, %v548, %v613
    %v615 = vmul.f32 %v600, %v543
    %v616 = vmul.f32 %v601, %v544
    %v617 = vmul.f32 %v602, %v545
    %v618 = vmul.f32 %v603, %v546
    %v619 = vmul.f32 %v614, %v549
    %v620 = vadd.f32 %v533, %v615
    %v621 = vadd.f32 %v534, %v616
    %v622 = vadd.f32 %v535, %v617
    %v623 = vadd.f32 %v536, %v618
    %v624 = vadd.f32 %v547, %v619
    %v625 = vmul.f32 %v615, %v615
    %v626 = vmul.f32 %v616, %v616
    %v627 = vmul.f32 %v617, %v617
    %v628 = vmul.f32 %v618, %v618
    %v629 = vmul.f32 %v551, %v551
    %v630 = vmul.f32 %v553, %v553
    %v631 = vmul.f32 %v555, %v555
    %v632 = vmul.f32 %v557, %v557
    %v633 = vrcp.pop %v629
    %v634 = vmul.f32 0.5, %v633
    %v635 = vrcp.pop %v630
    %v636 = vmul.f32 0.5, %v635
    %v637 = vrcp.pop %v631
    %v638 = vmul.f32 0.5, %v637
    %v639 = vrcp.pop %v632
    %v640 = vmul.f32 0.5, %v639
    %v641 = vmul.f32 %v625, %v634
    %v642 = vmul.f32 %v626, %v636
    %v643 = vmul.f32 %v627, %v638
    %v644 = vmul.f32 %v628, %v640
    %v645 = vadd.f32 %v538, %v641
    %v646 = vadd.f32 %v539, %v642
    %v647 = vadd.f32 %v540, %v643
    %v648 = vadd.f32 %v541, %v644
    %v649 = vmul.f32 %v620, %v620
    %v650 = vmul.f32 %v621, %v621
    %v651 = vmul.f32 %v622, %v622
    %v652 = vmul.f32 %v623, %v623
    %v653 = vmul.f32 %v649, 201.7144
    %v654 = vmul.f32 %v650, 201.7144
    %v655 = vmul.f32 %v651, 201.7144
    %v656 = vmul.f32 %v652, 201.7144
    %v657 = vsub.f32 %v645, %v653
    %v658 = vsub.f32 %v646, %v654
    %v659 = vsub.f32 %v647, %v655
    %v660 = vsub.f32 %v648, %v656
    %v661 = vmul.f32 %v619, %v619
    %v662 = vmul.f32 %v559, %v559
    %v663 = vrcp.pop %v662
    %v664 = vmul.f32 0.5, %v663
    %v665 = vmul.f32 %v661, %v664
    %v666 = vadd.f32 %v548, %v665
    %v667 = vmul.f32 %v624, %v624
    %v668 = vmul.f32 %v667, 201.7144
    %v669 = vsub.f32 %v666, %v668
    %vm670 = vcmask 80896
    %v671 = vsel %vm670, %v657, 0.0
    %v672 = vsel %vm670, %v658, 0.0
    %v673 = vadd.f32 %v671, %v672
    %v674 = vsel %vm670, %v659, 0.0
    %v675 = vadd.f32 %v673, %v674
    %v676 = vsel %vm670, %v660, 0.0
    %v677 = vadd.f32 %v675, %v676
    %678 = vadd.xlane.f32.xlu0 %v677
    %v679 = vpop.xlane.xlu0 %678
    %v680 = vrot.slane %v679, 4
    %v681 = vadd.f32 %v679, %v680
    %v682 = vrot.slane %v681, 2
    %v683 = vadd.f32 %v681, %v682
    %v684 = vrot.slane %v683, 1
    %v685 = vadd.f32 %v683, %v684
    %s686 = vtos %v685
    %vm687 = vcmask 73728
    %v688 = vsel %vm687, %v669, 0.0
    %689 = vadd.xlane.f32.xlu0 %v688
    %v690 = vpop.xlane.xlu0 %689
    %v691 = vrot.slane %v690, 4
    %v692 = vadd.f32 %v690, %v691
    %v693 = vrot.slane %v692, 2
    %v694 = vadd.f32 %v692, %v693
    %v695 = vrot.slane %v694, 1
    %v696 = vadd.f32 %v694, %v695
    %s697 = vtos %v696
    %s698 = sadd.f32 %s686, %s697
    %s699 = ssub.f32 -990.0, %s698
    %v700 = vlaneseq
    %v701 = vshrl.u32 %v700, 7
    %v702 = vsub.s32 0, %v701
    %v703 = vrot.slane %v624, %v702
    %v705 = vsel %vm182, %v532, 0
    %707 = vmatprep.subr.mxu0 0.0
    %708 = vmatpush1.msra.mxu0 0.0
    %709 = vmatprep.subr.mxu0 0.0
    %710 = vmatpush1.msra.mxu0 0.0
    %711 = vmatprep.subr.mxu0 0.0
    %712 = vmatpush1.msra.mxu0 0.0
    %713 = vmatprep.subr.mxu0 0.0
    %714 = vmatpush1.msra.mxu0 0.0
    %715 = vmatprep.subr.mxu0 0.0
    %716 = vmatpush1.msra.mxu0 0.0
    %717 = vmatprep.subr.mxu0 0.0
    %718 = vmatpush1.msra.mxu0 0.0
    %719 = vmatprep.subr.mxu0 0.0
    %720 = vmatpush1.msra.mxu0 0.0
    %721 = vmatprep.subr.mxu0 0.0
    %722 = vmatpush1.msra.mxu0 0.0
    %723 = vmatprep.subr.mxu0 0.0
    %724 = vmatpush1.msra.mxu0 0.0
    %725 = vmatprep.subr.mxu0 0.0
    %726 = vmatpush1.msra.mxu0 0.0
    %727 = vmatprep.subr.mxu0 0.0
    %728 = vmatpush1.msra.mxu0 0.0
    %729 = vmatprep.subr.mxu0 0.0
    %730 = vmatpush1.msra.mxu0 0.0
    %731 = vmatprep.subr.mxu0 0.0
    %732 = vmatpush1.msra.mxu0 %v623
    %733 = vmatprep.subr.mxu0 0.0
    %734 = vmatpush1.msra.mxu0 %v622
    %735 = vmatprep.subr.mxu0 0.0
    %736 = vmatpush1.msra.mxu0 %v621
    %737 = vmatprep.subr.mxu0 0.0
    %738 = vmatpush1.msra.mxu0 %v620
    %739 = vmatprep.subr.mxu0 0.0
    %740 = vmatpush2.msra.mxu0 0.0
    %741 = vmatprep.subr.mxu0 0.0
    %742 = vmatpush2.msra.mxu0 0.0
    %743 = vmatprep.subr.mxu0 0.0
    %744 = vmatpush2.msra.mxu0 0.0
    %745 = vmatprep.subr.mxu0 0.0
    %746 = vmatpush2.msra.mxu0 0.0
    %747 = vmatprep.subr.mxu0 0.0
    %748 = vmatpush2.msra.mxu0 0.0
    %749 = vmatprep.subr.mxu0 0.0
    %750 = vmatpush2.msra.mxu0 0.0
    %751 = vmatprep.subr.mxu0 0.0
    %752 = vmatpush2.msra.mxu0 0.0
    %753 = vmatprep.subr.mxu0 0.0
    %754 = vmatpush2.msra.mxu0 0.0
    %755 = vmatprep.subr.mxu0 0.0
    %756 = vmatpush2.msra.mxu0 0.0
    %757 = vmatprep.subr.mxu0 0.0
    %758 = vmatpush2.msra.mxu0 0.0
    %759 = vmatprep.subr.mxu0 0.0
    %760 = vmatpush2.msra.mxu0 0.0
    %761 = vmatprep.subr.mxu0 0.0
    %762 = vmatpush2.msra.mxu0 0.0
    %763 = vmatprep.subr.mxu0 0.0
    %764 = vmatpush2.msra.mxu0 0.0
    %765 = vmatprep.subr.mxu0 0.0
    %766 = vmatpush2.msra.mxu0 0.0
    %767 = vmatprep.subr.mxu0 0.0
    %768 = vmatpush2.msra.mxu0 0.0
    %769 = vmatprep.subr.mxu0 0.0
    %770 = vmatpush2.msra.mxu0 0.0
    %771 = vmatprep.mubr.f32.mxu0 0.0
    %772 = vmatmul.mubr.f32.gmra.mxu0 %v705
    %v773 = vpop.f32.mrf.mxu0
    %v774 = vadd.f32 %v703, %v773
    %v775 = vpop.f32.mrf.mxu0
    %776 = vdwg.mxu0
    %vm777 = vcmask 74752
    %778 = vst.msk [vmem:[#allocation6] sm:$0x3] %vm777, %v774
    %s779 = sadd.f32 %s211, %s454
    %s780 = sadd.f32 %s779, %s699
    %s781 = scalar_lea.smem [#allocation7], 0
    %782 = sst [smem:[%s781]] %s780
    // Predicated region
    $region34: #{tpu_custom_call.1} parent=1 // pred_check
      _
    $region35: #{tpu_custom_call.1} parent=1 // pred_check_branch
      %784 = sbr.rel (0) target = $region37
    $region36: #{tpu_custom_call.1} parent=1 // pred_region
      %s786 = ssub.s32 32, 32
      %787 = vsyncadd [#allocation4], %s786
      %s789 = sshll.u32 [#allocation6], 4
      %s790 = int_to_ptr.vmem [resolvable:$true] %s789
      %792 = dma.vmem_to_hbm [thread:$0]  %s790, 32, %s7, [#allocation4]
    $region37: #{tpu_custom_call.1} parent=1 // pred_fallthru
      _
    // Predicated region
    $region38: #{tpu_custom_call.1} parent=1 // pred_check
      _
    $region39: #{tpu_custom_call.1} parent=1 // pred_check_branch
      %794 = sbr.rel (0) target = $region41
    $region40: #{tpu_custom_call.1} parent=1 // pred_region
      %s796 = ssub.s32 16, 16
      %797 = vsyncadd [#allocation5], %s796
      %800 = dma.smem_to_hbm [#allocation7], 16, %s8, [#allocation5]
    $region41: #{tpu_custom_call.1} parent=1 // pred_fallthru
      _
    // Predicated region
    $region42: #{tpu_custom_call.1} parent=1 // pred_check
      _
    $region43: #{tpu_custom_call.1} parent=1 // pred_check_branch
      %802 = sbr.rel (0) target = $region45
    $region44: #{tpu_custom_call.1} parent=1 // pred_region
      %803 = dma.done [#allocation4], 32
    $region45: #{tpu_custom_call.1} parent=1 // pred_fallthru
      _
    // Predicated region
    $region46: #{tpu_custom_call.1} parent=1 // pred_check
      _
    $region47: #{tpu_custom_call.1} parent=1 // pred_check_branch
      %805 = sbr.rel (0) target = $region49
    $region48: #{tpu_custom_call.1} parent=1 // pred_region
      %806 = dma.done [#allocation5], 16
    $region49: #{tpu_custom_call.1} parent=1 // pred_fallthru
      _
    %807 = sfence
    %808 = vsyncpa [#allocation3], 1
    %809 = vsyncpa [#allocation4], 1
    %810 = vsyncpa [#allocation5], 1

</llo_original>
